<compile_context>
chip_gen: v7x
topology: tpu7x:2x2x1
jax: 0.10.0
libtpu: 0.0.40
codegen_flags: <defaults>
</compile_context>

<pallas_src>
import math

import jax
import jax.numpy as jnp
from jax.experimental import pallas as pl
from jax.experimental.pallas import tpu as pltpu


def multicrop_kernel(x_ref, wp_ref, w1_ref, b1_ref, w2_ref, b2_ref, wl_ref,
                     out_ref, acc_ref):
    n = pl.program_id(1)

    @pl.when(n == 0)
    def _init():
        acc_ref[...] = jnp.zeros_like(acc_ref)

    # Streaming sum over the (folded) patch axis.  The bf16 -> f32 cast is
    # fused into the reduction (no full materialized f32 copy of the
    # [TB, TN, P_fold] tile); the 1/N mean is folded into wp by the wrapper so
    # this loop is pure adds.
    acc_ref[...] += jnp.sum(x_ref[...], axis=1, dtype=jnp.float32)

    @pl.when(n == pl.num_programs(1) - 1)
    def _head():
        pooled = acc_ref[...]                           # [TB, P_fold]

        # ---- backbone: patch embedding of pooled patch stats -> cls embedding
        cls = jnp.dot(pooled, wp_ref[...], preferred_element_type=jnp.float32)

        # ---- DINOHead-style MLP ----
        h = jnp.dot(cls, w1_ref[...], preferred_element_type=jnp.float32) + b1_ref[...]
        # TODO(synk): PyTorch nn.GELU() default is exact erf GELU; tanh approx used here.
        h = jax.nn.gelu(h, approximate=True)
        z = jnp.dot(h, w2_ref[...], preferred_element_type=jnp.float32) + b2_ref[...]
        # L2 normalize bottleneck features; x*rsqrt(max(||x||^2,eps^2)) ==
        # x/max(||x||,eps), i.e. F.normalize(eps=1e-12) clamp semantics.
        nrm2 = jnp.sum(z * z, axis=-1, keepdims=True)
        z = z * jax.lax.rsqrt(jnp.maximum(nrm2, 1e-24))
        # weight-normalized last layer (no bias)
        logits = jnp.dot(z, wl_ref[...], preferred_element_type=jnp.float32)
        out_ref[...] = logits.astype(out_ref.dtype)


def init_params(key, patch_dim, embed_dim=128, hidden_dim=256,
                bottleneck_dim=128, out_dim=128):
    """Head dims are multiples of 128 so every MXU matmul is lane-dense."""
    k = jax.random.split(key, 6)
    wp = 0.02 * jax.random.normal(k[0], (patch_dim, embed_dim), jnp.float32)
    w1 = 0.02 * jax.random.normal(k[1], (embed_dim, hidden_dim), jnp.float32)
    b1 = 0.01 * jax.random.normal(k[2], (1, hidden_dim), jnp.float32)
    w2 = 0.02 * jax.random.normal(k[3], (hidden_dim, bottleneck_dim), jnp.float32)
    b2 = 0.01 * jax.random.normal(k[4], (1, bottleneck_dim), jnp.float32)
    wl_v = jax.random.normal(k[5], (bottleneck_dim, out_dim), jnp.float32)
    return (wp, w1, b1, w2, b2, wl_v)


def _round_up(x, m):
    return -(-x // m) * m


def _pick_tile(total, target, align):
    """Largest divisor of `total` that is <= target and a multiple of `align`
    (or `total` itself, which always satisfies the full-dim BlockSpec rule)."""
    if total <= target:
        return total
    start = target - (target % align)
    for d in range(start, 0, -align):
        if total % d == 0:
            return d
    return total


def _patchify(crop, patch, dtype):
    B, C, H, W = crop.shape
    nh, nw = H // patch, W // patch
    p = crop.reshape(B, C, nh, patch, nw, patch)
    p = p.transpose(0, 2, 4, 1, 3, 5).reshape(B, nh * nw, C * patch * patch)
    return p.astype(dtype)


def _vmem_capacity_bytes():
    try:
        return int(pltpu.get_tpu_info().vmem_capacity_bytes)
    except Exception:
        return 64 * 1024 * 1024          # conservative (v7x-sized) fallback


def _forward_one_resolution(crops, params, patch, compute_dtype, tile_b, tile_n):
    wp, w1, b1, w2, b2, wl_v = params

    # Patchify + bf16-cast each crop (one layout+cast fusion per crop) and
    # concatenate along batch (torch.cat(x, dim=0) within a resolution group).
    # TODO(synk): this still stages one bf16 copy of the activation stream in
    # HBM; consuming NCHW directly inside the kernel would remove it but needs
    # in-kernel reshapes across a non-128-aligned W (Mosaic relayout risk).
    pats = [_patchify(c, patch, compute_dtype) for c in crops]
    patches = pats[0] if len(pats) == 1 else jnp.concatenate(pats, axis=0)
    B_total, N_patches, patch_dim = patches.shape
    K = wl_v.shape[1]

    # Fold the 1/N mean into the patch-embed weight (kernel loop stays pure
    # adds) and re-normalize the weight-normed last layer each forward
    # (nn.utils.weight_norm with g frozen at 1, DINO norm_last_layer=True).
    wp_scaled = wp * (1.0 / N_patches)
    wl = wl_v / jnp.linalg.norm(wl_v, axis=0, keepdims=True)

    # ---- lane-dense feature axis --------------------------------------------
    # Fold k patches per row so the x last block dim is a multiple of 128;
    # sum-then-embed is unchanged because wp is stacked k times.  If folding
    # would blow up wp, zero-pad the feature axis to a multiple of 128 instead.
    k = 128 // math.gcd(patch_dim, 128)
    if k > 1 and k * patch_dim > 4096:
        k = 1
    if k > 1:
        P_fold = k * patch_dim
        feat_pad = 0
        wp_kernel = jnp.concatenate([wp_scaled] * k, axis=0)
    else:
        P_fold = _round_up(patch_dim, 128)
        feat_pad = P_fold - patch_dim
        wp_kernel = (wp_scaled if feat_pad == 0
                     else jnp.pad(wp_scaled, ((0, feat_pad), (0, 0))))

    # ---- tiling (generation-aware) -------------------------------------------
    itemsize = jnp.dtype(compute_dtype).itemsize
    sub_align = max(8, 32 // itemsize)            # 8 for f32, 16 for bf16
    vmem_cap = _vmem_capacity_bytes()
    # Per-x-buffer budget: bigger steps amortize the ~0.35us/step pipeline
    # overhead (matters most on v7x's ~3.2 TB/s HBM); BlockSpec double-buffers.
    budget = (16 << 20) if vmem_cap > (80 << 20) else (12 << 20)

    B_pad = _round_up(B_total, 8)
    if tile_b is None:
        tile_b = _pick_tile(B_pad, 256, 8)        # fill the MXU M dimension
        # Keep >= 2 batch tiles when possible so the "parallel" axis can shard
        # across v7x's 2 TensorCores (no-op on single-TC v5e/v6e).
        if B_pad // tile_b < 2 and B_pad >= 16:
            tile_b = _pick_tile(B_pad, max(8, B_pad // 2), 8)
    assert B_pad % tile_b == 0

    n_fold_raw = -(-N_patches // k)               # folded patch rows (pre-pad)
    if tile_n is None:
        target = budget // max(1, tile_b * P_fold * itemsize)
        target = max(sub_align, (target // sub_align) * sub_align)
        target = min(target, _round_up(n_fold_raw, sub_align))
        tile_n = sub_align
        cand = target
        while cand >= sub_align:
            # accept the largest tile whose zero-padding overhead is <= ~12%
            if _round_up(n_fold_raw, cand) - n_fold_raw <= max(n_fold_raw // 8, sub_align):
                tile_n = cand
                break
            cand -= sub_align
    n_fold = _round_up(n_fold_raw, tile_n)

    # Zero-pad batch / patch / feature axes (safe: the loop is a pure sum, the
    # 1/N fold uses the true N, padded wp rows are zero) and fold k patches per
    # row.  This removes the old full-axis _pick_tile fallback that could blow
    # past VMEM on shapes like N_patches=196.
    patches = jnp.pad(patches, ((0, B_pad - B_total),
                                (0, n_fold * k - N_patches),
                                (0, feat_pad)))
    if k > 1:
        patches = patches.reshape(B_pad, n_fold, P_fold)

    grid = (B_pad // tile_b, n_fold // tile_n)

    weights = (wp_kernel, w1, b1, w2, b2, wl)
    weight_bytes = sum(int(w.size) * w.dtype.itemsize for w in weights)
    in_flight = (2 * tile_b * tile_n * P_fold * itemsize   # x double buffer
                 + 2 * weight_bytes                        # weights (double-buffered)
                 + tile_b * P_fold * 4                     # f32 accumulator scratch
                 + 2 * tile_b * K * 4)                     # out double buffer
    vmem_limit = max(32 << 20, min(int(0.8 * vmem_cap), in_flight + (8 << 20)))

    def full_spec(a):
        nd = a.ndim
        return pl.BlockSpec(a.shape, lambda b, n, _nd=nd: (0,) * _nd)

    logits = pl.pallas_call(
        multicrop_kernel,
        out_shape=jax.ShapeDtypeStruct((B_pad, K), jnp.float32),
        grid=grid,
        in_specs=[
            pl.BlockSpec((tile_b, tile_n, P_fold), lambda b, n: (b, n, 0)),
            full_spec(wp_kernel), full_spec(w1), full_spec(b1),
            full_spec(w2), full_spec(b2), full_spec(wl),
        ],
        out_specs=pl.BlockSpec((tile_b, K), lambda b, n: (b, 0)),
        scratch_shapes=[pltpu.VMEM((tile_b, P_fold), jnp.float32)],
        compiler_params=pltpu.CompilerParams(
            # batch axis -> parallel (sharded across v7x's 2 TCs, no-op on 1-TC
            # chips); folded-patch axis -> arbitrary (streaming reduction).
            dimension_semantics=("parallel", "arbitrary"),
            vmem_limit_bytes=vmem_limit,
        ),
    )(patches, *weights)

    return logits[:B_total]


def multicrop_wrapper_forward(x, params, patch=4, *, compute_dtype=jnp.bfloat16,
                              tile_b=None, tile_n=None):
    """JAX/Pallas equivalent of MultiCropWrapper.forward (DINO)."""
    if not isinstance(x, (list, tuple)):
        print('multicrop', x.shape)   # trace-time side effect, as in the reference
        x = [x]

    # Like DINO's MultiCropWrapper, club consecutive crops that share one
    # resolution into a single forward pass (the backbone/head have no
    # cross-batch coupling, so per-group forwards == concat + single forward).
    groups = []
    for c in x:
        if groups and groups[-1][-1].shape[1:] == c.shape[1:]:
            groups[-1].append(c)
        else:
            groups.append([c])

    chunks = []
    for g in groups:
        logits = _forward_one_resolution(g, params, patch, compute_dtype,
                                         tile_b, tile_n)
        off = 0
        for c in g:                   # chunk back to per-crop tensors
            chunks.append(logits[off:off + c.shape[0]])
            off += c.shape[0]
    return tuple(chunks)


def _reference_forward(x_list, params, patch=4, compute_dtype=jnp.bfloat16):
    """Pure-JAX per-crop reference for correctness checking."""
    wp, w1, b1, w2, b2, wl_v = params
    wl = wl_v / jnp.linalg.norm(wl_v, axis=0, keepdims=True)
    outs = []
    for c in x_list:
        p = _patchify(c, patch, compute_dtype).astype(jnp.float32)
        pooled = jnp.mean(p, axis=1)
        cls = pooled @ wp
        h = jax.nn.gelu(cls @ w1 + b1, approximate=True)
        z = h @ w2 + b2
        z = z * jax.lax.rsqrt(jnp.maximum(jnp.sum(z * z, -1, keepdims=True), 1e-24))
        outs.append(z @ wl)
    return outs


if __name__ == "__main__":
    key = jax.random.PRNGKey(0)
    k_g1, k_g2, k_l1, k_params = jax.random.split(key, 4)

    patch = 4
    # two "global" crops at 32x32 and one "local" crop at 16x16 (mixed
    # resolutions exercise the per-resolution grouping path).
    global1 = jax.random.normal(k_g1, (2, 4, 32, 32), jnp.float32)
    global2 = jax.random.normal(k_g2, (2, 4, 32, 32), jnp.float32)
    local1 = jax.random.normal(k_l1, (2, 4, 16, 16), jnp.float32)
    crops = [global1, global2, local1]

    patch_dim = 4 * patch * patch     # C * p * p = 64 (folded to 128 lanes)
    params = init_params(k_params, patch_dim)

    # tile_n=16 forces two reduction steps on the global group so the streaming
    # accumulate + pl.when(last-step) head path is exercised at this toy size.
    chunks = multicrop_wrapper_forward(crops, params, patch=patch, tile_n=16)
    chunks = jax.block_until_ready(chunks)

    assert len(chunks) == 3
    assert all(c.shape == (2, 128) for c in chunks)
    assert all(bool(jnp.all(jnp.isfinite(c))) for c in chunks)

    # correctness vs pure-JAX reference (bf16 activation stream -> loose tol)
    ref = _reference_forward(crops, params, patch=patch)
    for got, want in zip(chunks, ref):
        assert bool(jnp.allclose(got, want, rtol=2e-2, atol=2e-2))

    print("KERNEL_OK")
</pallas_src>

<mosaic_0001>
module attributes {stable_mosaic.version = 11 : i64} {
  func.func @multicrop_kernel(%arg0: i32, %arg1: i32, %arg2: memref<8x16x128xbf16, #tpu.memory_space<vmem>>, %arg3: memref<128x128xf32, #tpu.memory_space<vmem>>, %arg4: memref<128x256xf32, #tpu.memory_space<vmem>>, %arg5: memref<1x256xf32, #tpu.memory_space<vmem>>, %arg6: memref<256x128xf32, #tpu.memory_space<vmem>>, %arg7: memref<1x128xf32, #tpu.memory_space<vmem>>, %arg8: memref<128x128xf32, #tpu.memory_space<vmem>>, %arg9: memref<8x128xf32, #tpu.memory_space<vmem>>, %arg10: memref<8x128xf32, #tpu.memory_space<vmem>>) attributes {dimension_semantics = [#tpu.dimension_semantics<parallel>, #tpu.dimension_semantics<arbitrary>], iteration_bounds = array<i64: 1, 2>, scalar_prefetch = 0 : i64, scratch_operands = 1 : i64, tpu.core_type = #tpu.core_type<tc>, window_params = [{transform_indices = @transform_0, window_bounds = array<i64: 8, 16, 128>}, {pipeline_mode = #tpu.pipeline_mode<synchronous>, transform_indices = @transform_1, window_bounds = array<i64: 128, 128>}, {pipeline_mode = #tpu.pipeline_mode<synchronous>, transform_indices = @transform_2, window_bounds = array<i64: 128, 256>}, {pipeline_mode = #tpu.pipeline_mode<synchronous>, transform_indices = @transform_3, window_bounds = array<i64: 1, 256>}, {pipeline_mode = #tpu.pipeline_mode<synchronous>, transform_indices = @transform_4, window_bounds = array<i64: 256, 128>}, {pipeline_mode = #tpu.pipeline_mode<synchronous>, transform_indices = @transform_5, window_bounds = array<i64: 1, 128>}, {pipeline_mode = #tpu.pipeline_mode<synchronous>, transform_indices = @transform_6, window_bounds = array<i64: 128, 128>}, {transform_indices = @transform_7, window_bounds = array<i64: 8, 128>}]} {
    %c0_i32 = arith.constant 0 : i32
    %0 = arith.cmpi eq, %arg1, %c0_i32 : i32
    %1 = arith.extui %0 : i1 to i32
    %c0_i32_0 = arith.constant 0 : i32
    %2 = arith.cmpi ne, %1, %c0_i32_0 : i32
    scf.if %2 {
      %cst_8 = arith.constant 0.000000e+00 : f32
      %12 = vector.broadcast %cst_8 : f32 to vector<8x128xf32>
      %c0_9 = arith.constant 0 : index
      %c0_10 = arith.constant 0 : index
      %13 = vector.load %arg10[%c0_9, %c0_10] : memref<8x128xf32, #tpu.memory_space<vmem>>, vector<8x128xf32>
      tpu.vector_store %arg10[%c0_9, %c0_10], %12 {strides = array<i32>} : memref<8x128xf32, #tpu.memory_space<vmem>>, vector<8x128xf32>,
    } else {
    }
    %c0 = arith.constant 0 : index
    %c0_1 = arith.constant 0 : index
    %3 = vector.load %arg10[%c0, %c0_1] : memref<8x128xf32, #tpu.memory_space<vmem>>, vector<8x128xf32>
    %c0_2 = arith.constant 0 : index
    %c0_3 = arith.constant 0 : index
    %c0_4 = arith.constant 0 : index
    %4 = vector.load %arg2[%c0_2, %c0_3, %c0_4] : memref<8x16x128xbf16, #tpu.memory_space<vmem>>, vector<8x16x128xbf16>
    %5 = arith.extf %4 : vector<8x16x128xbf16> to vector<8x16x128xf32>
    %cst = arith.constant dense<0.000000e+00> : vector<8x128xf32>
    %6 = vector.multi_reduction <add>, %5, %cst [1] : vector<8x16x128xf32> to vector<8x128xf32>
    %7 = arith.addf %3, %6 : vector<8x128xf32>
    %c0_5 = arith.constant 0 : index
    %c0_6 = arith.constant 0 : index
    %8 = vector.load %arg10[%c0_5, %c0_6] : memref<8x128xf32, #tpu.memory_space<vmem>>, vector<8x128xf32>
    tpu.vector_store %arg10[%c0_5, %c0_6], %7 {strides = array<i32>} : memref<8x128xf32, #tpu.memory_space<vmem>>, vector<8x128xf32>,
    %c1_i32 = arith.constant 1 : i32
    %9 = arith.cmpi eq, %arg1, %c1_i32 : i32
    %10 = arith.extui %9 : i1 to i32
    %c0_i32_7 = arith.constant 0 : i32
    %11 = arith.cmpi ne, %10, %c0_i32_7 : i32
    scf.if %11 {
      %c0_8 = arith.constant 0 : index
      %c0_9 = arith.constant 0 : index
      %12 = vector.load %arg10[%c0_8, %c0_9] : memref<8x128xf32, #tpu.memory_space<vmem>>, vector<8x128xf32>
      %c0_10 = arith.constant 0 : index
      %c0_11 = arith.constant 0 : index
      %13 = vector.load %arg3[%c0_10, %c0_11] : memref<128x128xf32, #tpu.memory_space<vmem>>, vector<128x128xf32>
      %cst_12 = arith.constant dense<0.000000e+00> : vector<8x128xf32>
      %14 = tpu.matmul %12, %13, %cst_12 {dimension_numbers = #tpu.dot_dimension_numbers<[1], [0], [0], [1], [0, 0, 1, 1], [], []>} : vector<8x128xf32>, vector<128x128xf32>, vector<8x128xf32> -> vector<8x128xf32>
      %c0_13 = arith.constant 0 : index
      %c0_14 = arith.constant 0 : index
      %15 = vector.load %arg4[%c0_13, %c0_14] : memref<128x256xf32, #tpu.memory_space<vmem>>, vector<128x256xf32>
      %cst_15 = arith.constant dense<0.000000e+00> : vector<8x256xf32>
      %16 = tpu.matmul %14, %15, %cst_15 {dimension_numbers = #tpu.dot_dimension_numbers<[1], [0], [0], [1], [0, 0, 1, 1], [], []>} : vector<8x128xf32>, vector<128x256xf32>, vector<8x256xf32> -> vector<8x256xf32>
      %c0_16 = arith.constant 0 : index
      %c0_17 = arith.constant 0 : index
      %17 = vector.load %arg5[%c0_16, %c0_17] : memref<1x256xf32, #tpu.memory_space<vmem>>, vector<1x256xf32>
      %18 = vector.broadcast %17 : vector<1x256xf32> to vector<8x256xf32>
      %19 = arith.addf %16, %18 : vector<8x256xf32>
      %20 = arith.mulf %19, %19 : vector<8x256xf32>
      %21 = arith.mulf %19, %20 : vector<8x256xf32>
      %cst_18 = arith.constant 4.471500e-02 : f32
      %22 = vector.broadcast %cst_18 : f32 to vector<8x256xf32>
      %23 = arith.mulf %22, %21 : vector<8x256xf32>
      %24 = arith.addf %19, %23 : vector<8x256xf32>
      %cst_19 = arith.constant 0.797884583 : f32
      %25 = vector.broadcast %cst_19 : f32 to vector<8x256xf32>
      %26 = arith.mulf %25, %24 : vector<8x256xf32>
      %27 = math.tanh %26 : vector<8x256xf32>
      %cst_20 = arith.constant 1.000000e+00 : f32
      %28 = vector.broadcast %cst_20 : f32 to vector<8x256xf32>
      %29 = arith.addf %28, %27 : vector<8x256xf32>
      %cst_21 = arith.constant 5.000000e-01 : f32
      %30 = vector.broadcast %cst_21 : f32 to vector<8x256xf32>
      %31 = arith.mulf %30, %29 : vector<8x256xf32>
      %32 = arith.mulf %19, %31 : vector<8x256xf32>
      %c0_22 = arith.constant 0 : index
      %c0_23 = arith.constant 0 : index
      %33 = vector.load %arg6[%c0_22, %c0_23] : memref<256x128xf32, #tpu.memory_space<vmem>>, vector<256x128xf32>
      %cst_24 = arith.constant dense<0.000000e+00> : vector<8x128xf32>
      %34 = tpu.matmul %32, %33, %cst_24 {dimension_numbers = #tpu.dot_dimension_numbers<[1], [0], [0], [1], [0, 0, 1, 1], [], []>} : vector<8x256xf32>, vector<256x128xf32>, vector<8x128xf32> -> vector<8x128xf32>
      %c0_25 = arith.constant 0 : index
      %c0_26 = arith.constant 0 : index
      %35 = vector.load %arg7[%c0_25, %c0_26] : memref<1x128xf32, #tpu.memory_space<vmem>>, vector<1x128xf32>
      %36 = vector.broadcast %35 : vector<1x128xf32> to vector<8x128xf32>
      %37 = arith.addf %34, %36 : vector<8x128xf32>
      %38 = arith.mulf %37, %37 : vector<8x128xf32>
      %cst_27 = arith.constant dense<0.000000e+00> : vector<8xf32>
      %39 = vector.multi_reduction <add>, %38, %cst_27 [1] : vector<8x128xf32> to vector<8xf32>
      %40 = vector.shape_cast %39 : vector<8xf32> to vector<8x1xf32>
      %cst_28 = arith.constant 1.000000e-24 : f32
      %41 = vector.broadcast %cst_28 : f32 to vector<8x1xf32>
      %42 = arith.maximumf %40, %41 : vector<8x1xf32>
      %43 = math.rsqrt %42 : vector<8x1xf32>
      %44 = vector.broadcast %43 : vector<8x1xf32> to vector<8x128xf32>
      %45 = arith.mulf %37, %44 : vector<8x128xf32>
      %c0_29 = arith.constant 0 : index
      %c0_30 = arith.constant 0 : index
      %46 = vector.load %arg8[%c0_29, %c0_30] : memref<128x128xf32, #tpu.memory_space<vmem>>, vector<128x128xf32>
      %cst_31 = arith.constant dense<0.000000e+00> : vector<8x128xf32>
      %47 = tpu.matmul %45, %46, %cst_31 {dimension_numbers = #tpu.dot_dimension_numbers<[1], [0], [0], [1], [0, 0, 1, 1], [], []>} : vector<8x128xf32>, vector<128x128xf32>, vector<8x128xf32> -> vector<8x128xf32>
      %c0_32 = arith.constant 0 : index
      %c0_33 = arith.constant 0 : index
      %48 = vector.load %arg9[%c0_32, %c0_33] : memref<8x128xf32, #tpu.memory_space<vmem>>, vector<8x128xf32>
      tpu.vector_store %arg9[%c0_32, %c0_33], %47 {strides = array<i32>} : memref<8x128xf32, #tpu.memory_space<vmem>>, vector<8x128xf32>,
    } else {
    }
    return
  }
  func.func @transform_0(%arg0: i32, %arg1: i32) -> (i32, i32, i32) {
    %c0_i32 = arith.constant 0 : i32
    %c0_i32_0 = arith.constant 0 : i32
    return %arg0, %arg1, %c0_i32 : i32, i32, i32
  }
  func.func @transform_1(%arg0: i32, %arg1: i32) -> (i32, i32) {
    %c0_i32 = arith.constant 0 : i32
    %c0_i32_0 = arith.constant 0 : i32
    %c0_i32_1 = arith.constant 0 : i32
    return %c0_i32, %c0_i32_0 : i32, i32
  }
  func.func @transform_2(%arg0: i32, %arg1: i32) -> (i32, i32) {
    %c0_i32 = arith.constant 0 : i32
    %c0_i32_0 = arith.constant 0 : i32
    %c0_i32_1 = arith.constant 0 : i32
    return %c0_i32, %c0_i32_0 : i32, i32
  }
  func.func @transform_3(%arg0: i32, %arg1: i32) -> (i32, i32) {
    %c0_i32 = arith.constant 0 : i32
    %c0_i32_0 = arith.constant 0 : i32
    %c0_i32_1 = arith.constant 0 : i32
    return %c0_i32, %c0_i32_0 : i32, i32
  }
  func.func @transform_4(%arg0: i32, %arg1: i32) -> (i32, i32) {
    %c0_i32 = arith.constant 0 : i32
    %c0_i32_0 = arith.constant 0 : i32
    %c0_i32_1 = arith.constant 0 : i32
    return %c0_i32, %c0_i32_0 : i32, i32
  }
  func.func @transform_5(%arg0: i32, %arg1: i32) -> (i32, i32) {
    %c0_i32 = arith.constant 0 : i32
    %c0_i32_0 = arith.constant 0 : i32
    %c0_i32_1 = arith.constant 0 : i32
    return %c0_i32, %c0_i32_0 : i32, i32
  }
  func.func @transform_6(%arg0: i32, %arg1: i32) -> (i32, i32) {
    %c0_i32 = arith.constant 0 : i32
    %c0_i32_0 = arith.constant 0 : i32
    %c0_i32_1 = arith.constant 0 : i32
    return %c0_i32, %c0_i32_0 : i32, i32
  }
  func.func @transform_7(%arg0: i32, %arg1: i32) -> (i32, i32) {
    %c0_i32 = arith.constant 0 : i32
    %c0_i32_0 = arith.constant 0 : i32
    return %arg0, %c0_i32 : i32, i32
  }
}

</mosaic_0001>

<llo_original>
// kernel: tpu_custom_call.1
$region0: #{tpu_custom_call.1}
  #allocation0 [shape = 'u32[]', space=smem, size = 0x4, offset = 0x4, fixed_abs, tag = 'smem constant byte address 0x4 - core index']
  #allocation1 [shape = 'u32[144,128]{1,0:T(1,128)}', space=vmem, size = 0x12000, scoped, tag = 'internal scratch']
  #allocation2 [shape = 'f32[8,128]{1,0:T(8,128)}', space=vmem, size = 0x1000, scoped, tag = 'scratch operand']
  #allocation13 [shape = 's32[]', space=sflag, size = 0x4, offset = 0, fixed_abs, tag = 'sflag constant byte address 0x0 - dummy sync flag']
  %s0 = inlined_call_operand.hbm [shape: bf16[8,32,128], index: 0, kind: input, shape index: {}]
  %s1 = inlined_call_operand.hbm [shape: f32[128,128], index: 1, kind: input, shape index: {}]
  %s2 = inlined_call_operand.hbm [shape: f32[128,256], index: 2, kind: input, shape index: {}]
  %s3 = inlined_call_operand.vmem [shape: f32[1,256], index: 3, kind: input, shape index: {}]
  %s4 = inlined_call_operand.hbm [shape: f32[256,128], index: 4, kind: input, shape index: {}]
  %s5 = inlined_call_operand.vmem [shape: f32[1,128], index: 5, kind: input, shape index: {}]
  %s6 = inlined_call_operand.hbm [shape: f32[128,128], index: 6, kind: input, shape index: {}]
  %s7 = inlined_call_operand.hbm [shape: f32[8,128], index: 7, kind: output, shape index: {}]
  %s8 = sld [smem:[#allocation0]]
  $region89: #{tpu_custom_call.1} parent=0
    _
  %s10 = ssub.s32 1, %s8
  %s11 = scalar_select 0, %s10, %s8
  $region1: #{tpu_custom_call.1} parent=0
    #allocation3 [shape = 'u8[65536]{0}', space=vmem, size = 0x10000, scoped, tag = 'input window, operand 0']
    #allocation4 [shape = 's32[2]{0}', space=sflag, size = 0x8, scoped, tag = 'scoped memory for tpu_custom_call.1']
    #allocation5 [shape = 's32[2]{0}', space=sflag, size = 0x8, scoped, tag = 'scoped memory for tpu_custom_call.1']
    #allocation6 [shape = 'u8[65536]{0}', space=vmem, size = 0x10000, scoped, tag = 'input window, operand 1, single buffered']
    #allocation7 [shape = 's32[1]{0}', space=sflag, size = 0x4, scoped, tag = 'scoped memory for tpu_custom_call.1']
    #allocation8 [shape = 'u8[131072]{0}', space=vmem, size = 0x20000, scoped, tag = 'input window, operand 2, single buffered']
    #allocation9 [shape = 'u8[131072]{0}', space=vmem, size = 0x20000, scoped, tag = 'input window, operand 4, single buffered']
    #allocation10 [shape = 's32[1]{0}', space=sflag, size = 0x4, scoped, tag = 'scoped memory for tpu_custom_call.1']
    #allocation11 [shape = 'u8[65536]{0}', space=vmem, size = 0x10000, scoped, tag = 'input window, operand 6, single buffered']
    #allocation12 [shape = 'u8[4096]{0}', space=vmem, size = 0x1000, scoped, tag = 'output window, operand 0, single buffered']
    %12 = vsyncpa [#allocation4], 0
    %s13 = scalar_lea.sflag [#allocation4], 1
    %14 = vsyncpa %s13, 0
    %15 = vsyncpa [#allocation7], 0
    %16 = vsyncpa [#allocation10], 0
    %17 = vsyncpa [#allocation5], 0
    loop: start=0, step=1, limit=4
    $region2: #{tpu_custom_call.1} parent=1 // loop_pre_header
      _
    $region3: #{tpu_custom_call.1} parent=1 // loop_header
      %s19 = sphi 0, %s23
      %p20 = scmp.ge.s32.totalorder %s19, 4
      %s26 = sphi 0, %s38
      %s27 = sphi 0, %s34
      %s28 = sphi 0, %s26
      %s29 = sphi 0, %s27
      %s30 = sphi 0, %s28
      %s31 = sphi 0, %s29
      %s43 = sphi 0, %s45
      %s46 = sphi 0, %s43
      %s47 = sphi 0, %s46
      %s63 = sphi 0, %s47
      %s67 = sphi 0, %s67
      %s69 = sphi 0, %s67
      %s70 = sphi 0, %s69
      %s84 = sphi 0, %s70
      %s88 = sphi 0, %s88
      %s90 = sphi 0, %s88
      %s91 = sphi 0, %s90
      %s105 = sphi 0, %s91
      %s109 = sphi 0, %s109
      %s111 = sphi 0, %s109
      %s112 = sphi 0, %s111
      %s126 = sphi 0, %s112
      %s130 = sphi 0, %s130
      %s132 = sphi 0, %s130
      %s133 = sphi 0, %s132
      %s147 = sphi 0, %s133
      %s151 = sphi 0, %s151
      %s153 = sphi 0, %s151
      %s154 = sphi 0, %s153
      %s168 = sphi 0, %s154
      %s172 = sphi 0, %s172
      %s174 = sphi 0, %s172
      %s175 = sphi 0, %s174
      %s189 = sphi 0, %s175
      %s195 = sphi 0, %s197
      %s198 = sphi 0, %s195
      %s199 = sphi 0, %s198
      %s215 = sphi 0, %s199
    $region4: #{tpu_custom_call.1} parent=1 // loop_header_branch
      %22 = sbr.rel (%p20) target = $region8
    $region5: #{tpu_custom_call.1} parent=1 // loop_body
      %s24 = ssub.s32 %s19, 1
      %s25 = ssub.s32 %s19, 2
      %s32 = sadd.s32 1, %s27
      %p33 = scmp.ge.s32.totalorder %s32, 2
      %s34 = scalar_select %p33, 0, %s32
      %s35 = sadd.s32 1, %s26
      %s36 = scalar_select %p33, %s35, %s26
      %p37 = scmp.ge.s32.totalorder %s36, 1
      %s38 = scalar_select %p37, 0, %s36
      %s39 = ssub.s32 %s26, %s38
      %s40 = ssub.s32 %s27, %s34
      %s41 = sor.u32 %s39, %s40
      %p42 = scmp.eq.s32.totalorder %s41, 0
      %s44 = sadd.s32 %s43, 1
      %s45 = scalar_select %p42, %s43, %s44
      %p48 = pneg %p42
      %p49 = scmp.eq.s32.totalorder %s19, 1
      %p50 = por %p48, %p49
      %p51 = scmp.ne.s32.totalorder %s43, %s46
      %p52 = scmp.eq.s32.totalorder %s19, 0
      %p53 = por %p51, %p52
      %p54 = scmp.ne.s32.totalorder %s43, %s46
      %p55 = scmp.eq.s32.totalorder %s24, 1
      %p56 = por %p54, %p55
      %p57 = scmp.ne.s32.totalorder %s46, %s47
      %p58 = scmp.eq.s32.totalorder %s24, 0
      %p59 = por %p57, %p58
      %p60 = scmp.ne.s32.totalorder %s46, %s47
      %p61 = scmp.eq.s32.totalorder %s25, 1
      %p62 = por %p60, %p61
      %p64 = scmp.ne.s32.totalorder %s47, %s63
      %p65 = scmp.eq.s32.totalorder %s25, 0
      %p66 = por %p64, %p65
      %s68 = sadd.s32 %s67, 1
      %p71 = scmp.eq.s32.totalorder %s19, 1
      %p72 = scmp.ne.s32.totalorder %s67, %s69
      %p73 = scmp.eq.s32.totalorder %s19, 0
      %p74 = por %p72, %p73
      %p75 = scmp.ne.s32.totalorder %s67, %s69
      %p76 = scmp.eq.s32.totalorder %s24, 1
      %p77 = por %p75, %p76
      %p78 = scmp.ne.s32.totalorder %s69, %s70
      %p79 = scmp.eq.s32.totalorder %s24, 0
      %p80 = por %p78, %p79
      %p81 = scmp.ne.s32.totalorder %s69, %s70
      %p82 = scmp.eq.s32.totalorder %s25, 1
      %p83 = por %p81, %p82
      %p85 = scmp.ne.s32.totalorder %s70, %s84
      %p86 = scmp.eq.s32.totalorder %s25, 0
      %p87 = por %p85, %p86
      %s89 = sadd.s32 %s88, 1
      %p92 = scmp.eq.s32.totalorder %s19, 1
      %p93 = scmp.ne.s32.totalorder %s88, %s90
      %p94 = scmp.eq.s32.totalorder %s19, 0
      %p95 = por %p93, %p94
      %p96 = scmp.ne.s32.totalorder %s88, %s90
      %p97 = scmp.eq.s32.totalorder %s24, 1
      %p98 = por %p96, %p97
      %p99 = scmp.ne.s32.totalorder %s90, %s91
      %p100 = scmp.eq.s32.totalorder %s24, 0
      %p101 = por %p99, %p100
      %p102 = scmp.ne.s32.totalorder %s90, %s91
      %p103 = scmp.eq.s32.totalorder %s25, 1
      %p104 = por %p102, %p103
      %p106 = scmp.ne.s32.totalorder %s91, %s105
      %p107 = scmp.eq.s32.totalorder %s25, 0
      %p108 = por %p106, %p107
      %s110 = sadd.s32 %s109, 1
      %p113 = scmp.eq.s32.totalorder %s19, 1
      %p114 = scmp.ne.s32.totalorder %s109, %s111
      %p115 = scmp.eq.s32.totalorder %s19, 0
      %p116 = por %p114, %p115
      %p117 = scmp.ne.s32.totalorder %s109, %s111
      %p118 = scmp.eq.s32.totalorder %s24, 1
      %p119 = por %p117, %p118
      %p120 = scmp.ne.s32.totalorder %s111, %s112
      %p121 = scmp.eq.s32.totalorder %s24, 0
      %p122 = por %p120, %p121
      %p123 = scmp.ne.s32.totalorder %s111, %s112
      %p124 = scmp.eq.s32.totalorder %s25, 1
      %p125 = por %p123, %p124
      %p127 = scmp.ne.s32.totalorder %s112, %s126
      %p128 = scmp.eq.s32.totalorder %s25, 0
      %p129 = por %p127, %p128
      %s131 = sadd.s32 %s130, 1
      %p134 = scmp.eq.s32.totalorder %s19, 1
      %p135 = scmp.ne.s32.totalorder %s130, %s132
      %p136 = scmp.eq.s32.totalorder %s19, 0
      %p137 = por %p135, %p136
      %p138 = scmp.ne.s32.totalorder %s130, %s132
      %p139 = scmp.eq.s32.totalorder %s24, 1
      %p140 = por %p138, %p139
      %p141 = scmp.ne.s32.totalorder %s132, %s133
      %p142 = scmp.eq.s32.totalorder %s24, 0
      %p143 = por %p141, %p142
      %p144 = scmp.ne.s32.totalorder %s132, %s133
      %p145 = scmp.eq.s32.totalorder %s25, 1
      %p146 = por %p144, %p145
      %p148 = scmp.ne.s32.totalorder %s133, %s147
      %p149 = scmp.eq.s32.totalorder %s25, 0
      %p150 = por %p148, %p149
      %s152 = sadd.s32 %s151, 1
      %p155 = scmp.eq.s32.totalorder %s19, 1
      %p156 = scmp.ne.s32.totalorder %s151, %s153
      %p157 = scmp.eq.s32.totalorder %s19, 0
      %p158 = por %p156, %p157
      %p159 = scmp.ne.s32.totalorder %s151, %s153
      %p160 = scmp.eq.s32.totalorder %s24, 1
      %p161 = por %p159, %p160
      %p162 = scmp.ne.s32.totalorder %s153, %s154
      %p163 = scmp.eq.s32.totalorder %s24, 0
      %p164 = por %p162, %p163
      %p165 = scmp.ne.s32.totalorder %s153, %s154
      %p166 = scmp.eq.s32.totalorder %s25, 1
      %p167 = por %p165, %p166
      %p169 = scmp.ne.s32.totalorder %s154, %s168
      %p170 = scmp.eq.s32.totalorder %s25, 0
      %p171 = por %p169, %p170
      %s173 = sadd.s32 %s172, 1
      %p176 = scmp.eq.s32.totalorder %s19, 1
      %p177 = scmp.ne.s32.totalorder %s172, %s174
      %p178 = scmp.eq.s32.totalorder %s19, 0
      %p179 = por %p177, %p178
      %p180 = scmp.ne.s32.totalorder %s172, %s174
      %p181 = scmp.eq.s32.totalorder %s24, 1
      %p182 = por %p180, %p181
      %p183 = scmp.ne.s32.totalorder %s174, %s175
      %p184 = scmp.eq.s32.totalorder %s24, 0
      %p185 = por %p183, %p184
      %p186 = scmp.ne.s32.totalorder %s174, %s175
      %p187 = scmp.eq.s32.totalorder %s25, 1
      %p188 = por %p186, %p187
      %p190 = scmp.ne.s32.totalorder %s175, %s189
      %p191 = scmp.eq.s32.totalorder %s25, 0
      %p192 = por %p190, %p191
      %s193 = ssub.s32 %s26, %s38
      %p194 = scmp.eq.s32.totalorder %s193, 0
      %s196 = sadd.s32 %s195, 1
      %s197 = scalar_select %p194, %s195, %s196
      %p200 = pneg %p194
      %p201 = scmp.eq.s32.totalorder %s19, 1
      %p202 = por %p200, %p201
      %p203 = scmp.ne.s32.totalorder %s195, %s198
      %p204 = scmp.eq.s32.totalorder %s19, 0
      %p205 = por %p203, %p204
      %p206 = scmp.ne.s32.totalorder %s195, %s198
      %p207 = scmp.eq.s32.totalorder %s24, 1
      %p208 = por %p206, %p207
      %p209 = scmp.ne.s32.totalorder %s198, %s199
      %p210 = scmp.eq.s32.totalorder %s24, 0
      %p211 = por %p209, %p210
      %p212 = scmp.ne.s32.totalorder %s198, %s199
      %p213 = scmp.eq.s32.totalorder %s25, 1
      %p214 = por %p212, %p213
      %p216 = scmp.ne.s32.totalorder %s199, %s215
      %p217 = scmp.eq.s32.totalorder %s25, 0
      %p218 = por %p216, %p217
      %p219 = scmp.le.s32.totalorder 1, %s19
      %p220 = scmp.lt.s32.totalorder %s19, 3
      %p221 = pnand %p219, %p220
      %p222 = pneg %p221
      // Predicated region
      $region9: #{tpu_custom_call.1} parent=5 // pred_check
        _
      $region10: #{tpu_custom_call.1} parent=5 // pred_check_branch
        %224 = sbr.rel (%p221) target = $region12
      $region11: #{tpu_custom_call.1} parent=5 // pred_region
        %s225 = ssub.s32 %s19, 1
        // Predicated region
        $region13: #{tpu_custom_call.1} parent=11 // pred_check
          %p226 = pneg %p80
        $region14: #{tpu_custom_call.1} parent=11 // pred_check_branch
          %228 = sbr.rel (%p226) target = $region16
        $region15: #{tpu_custom_call.1} parent=11 // pred_region
          %s230 = ssub.s32 2048, 2048
          %231 = vsyncadd [#allocation7], %s230
          %s232 = sshll.u32 [#allocation6], 4
          %s233 = int_to_ptr.vmem [resolvable:$true] %s232
          %238 = dma.hbm_to_vmem [thread:$0]  %s1, 2048, %s233, [#allocation7], 128, 128, 8
        $region16: #{tpu_custom_call.1} parent=11 // pred_fallthru
          _
        // Predicated region
        $region17: #{tpu_custom_call.1} parent=11 // pred_check
          %p239 = pneg %p101
        $region18: #{tpu_custom_call.1} parent=11 // pred_check_branch
          %241 = sbr.rel (%p239) target = $region20
        $region19: #{tpu_custom_call.1} parent=11 // pred_region
          %s243 = ssub.s32 4096, 4096
          %244 = vsyncadd [#allocation7], %s243
          %s245 = sshll.u32 [#allocation8], 4
          %s246 = int_to_ptr.vmem [resolvable:$true] %s245
          %251 = dma.hbm_to_vmem [thread:$0]  %s2, 4096, %s246, [#allocation7], 256, 256, 16
        $region20: #{tpu_custom_call.1} parent=11 // pred_fallthru
          _
        // Predicated region
        $region21: #{tpu_custom_call.1} parent=11 // pred_check
          %p252 = pneg %p122
        $region22: #{tpu_custom_call.1} parent=11 // pred_check_branch
          %254 = sbr.rel (%p252) target = $region24
        $region23: #{tpu_custom_call.1} parent=11 // pred_region
          _
        $region24: #{tpu_custom_call.1} parent=11 // pred_fallthru
          _
        // Predicated region
        $region25: #{tpu_custom_call.1} parent=11 // pred_check
          %p255 = pneg %p143
        $region26: #{tpu_custom_call.1} parent=11 // pred_check_branch
          %257 = sbr.rel (%p255) target = $region28
        $region27: #{tpu_custom_call.1} parent=11 // pred_region
          %s259 = ssub.s32 4096, 4096
          %260 = vsyncadd [#allocation10], %s259
          %s261 = sshll.u32 [#allocation9], 4
          %s262 = int_to_ptr.vmem [resolvable:$true] %s261
          %267 = dma.hbm_to_vmem [thread:$0]  %s4, 4096, %s262, [#allocation10], 128, 128, 8
        $region28: #{tpu_custom_call.1} parent=11 // pred_fallthru
          _
        // Predicated region
        $region29: #{tpu_custom_call.1} parent=11 // pred_check
          %p268 = pneg %p164
        $region30: #{tpu_custom_call.1} parent=11 // pred_check_branch
          %270 = sbr.rel (%p268) target = $region32
        $region31: #{tpu_custom_call.1} parent=11 // pred_region
          _
        $region32: #{tpu_custom_call.1} parent=11 // pred_fallthru
          _
        // Predicated region
        $region33: #{tpu_custom_call.1} parent=11 // pred_check
          %p271 = pneg %p185
        $region34: #{tpu_custom_call.1} parent=11 // pred_check_branch
          %273 = sbr.rel (%p271) target = $region36
        $region35: #{tpu_custom_call.1} parent=11 // pred_region
          %s275 = ssub.s32 2048, 2048
          %276 = vsyncadd [#allocation10], %s275
          %s277 = sshll.u32 [#allocation11], 4
          %s278 = int_to_ptr.vmem [resolvable:$true] %s277
          %283 = dma.hbm_to_vmem [thread:$0]  %s6, 2048, %s278, [#allocation10], 128, 128, 8
        $region36: #{tpu_custom_call.1} parent=11 // pred_fallthru
          _
      $region12: #{tpu_custom_call.1} parent=5 // pred_fallthru
        _
      %p284 = scmp.lt.s32.totalorder %s19, 2
      // Predicated region
      $region37: #{tpu_custom_call.1} parent=5 // pred_check
        %p285 = pneg %p284
      $region38: #{tpu_custom_call.1} parent=5 // pred_check_branch
        %287 = sbr.rel (%p285) target = $region40
      $region39: #{tpu_custom_call.1} parent=5 // pred_region
        // Predicated region
        $region41: #{tpu_custom_call.1} parent=39 // pred_check
          %p288 = pneg %p53
        $region42: #{tpu_custom_call.1} parent=39 // pred_check_branch
          %290 = sbr.rel (%p288) target = $region44
        $region43: #{tpu_custom_call.1} parent=39 // pred_region
          #allocation14 [shape = 'u32[6]{0}', space=smem, size = 0x18, scoped, tag = 'DMA stride descriptor']
          %s291 = sand.u32 %s43, 1
          %s292 = scalar_lea.sflag [#allocation4], %s291
          %s293 = sand.u32 %s43, 1
          %s294 = smul.addr %s293, 64
          %s295 = scalar_lea.vmem [#allocation3], %s294
          %s296 = smul.u32 8, %s26
          %s297 = smul.u32 2, %s27
          %s299 = ssub.s32 1024, 1024
          %300 = vsyncadd %s292, %s299
          %s301 = smul.addr %s296, 4
          %s302 = sadd.s32 %s297, %s301
          %s303 = smul.addr %s302, 64
          %s304 = scalar_lea.hbm %s0, %s303
          %s306 = sshll.u32 1, 14
          %s307 = sxor.u32 4294967295, %s306
          %s309 = sld [smem:[#allocation0]]
          %s310 = sadd.s32 2, %s309
          %s312 = sshll.u32 7, 26
          %s313 = sxor.u32 4294967295, %s312
          %s314 = sand.u32 0, %s313
          %s315 = sshll.u32 %s310, 26
          %s316 = sor.u32 %s314, %s315
          %s317 = sshll.u32 %s295, 4
          %s318 = int_to_ptr.vmem [resolvable:$true] %s317
          %324 = sst [smem:[#allocation14]] 256
          %s325 = scalar_lea.smem [#allocation14], 1
          %326 = sst [smem:[%s325]] 128
          %s327 = scalar_lea.smem [#allocation14], 2
          %328 = sst [smem:[%s327]] 2
          %s329 = scalar_lea.smem [#allocation14], 3
          %330 = sst [smem:[%s329]] 64
          %s331 = scalar_lea.smem [#allocation14], 4
          %332 = sst [smem:[%s331]] 64
          %s333 = scalar_lea.smem [#allocation14], 5
          %334 = sst [smem:[%s333]] 4
          %336 = dma.general %s304, 1024, %s318, %s292, [#allocation13], [#allocation14], %s316, 0
        $region44: #{tpu_custom_call.1} parent=39 // pred_fallthru
          _
      $region40: #{tpu_custom_call.1} parent=5 // pred_fallthru
        _
      %p337 = scmp.le.s32.totalorder 1, %s19
      %p338 = scmp.lt.s32.totalorder %s19, 3
      %p339 = pnand %p337, %p338
      %p340 = pneg %p339
      // Predicated region
      $region45: #{tpu_custom_call.1} parent=5 // pred_check
        _
      $region46: #{tpu_custom_call.1} parent=5 // pred_check_branch
        %342 = sbr.rel (%p339) target = $region48
      $region47: #{tpu_custom_call.1} parent=5 // pred_region
        %s343 = ssub.s32 %s19, 1
        %s344 = sand.u32 %s46, 1
        %s345 = scalar_lea.sflag [#allocation4], %s344
        %s346 = sand.u32 %s46, 1
        %s347 = smul.addr %s346, 64
        %s348 = scalar_lea.vmem [#allocation3], %s347
        // Predicated region
        $region49: #{tpu_custom_call.1} parent=47 // pred_check
          %p349 = pneg %p59
        $region50: #{tpu_custom_call.1} parent=47 // pred_check_branch
          %351 = sbr.rel (%p349) target = $region52
        $region51: #{tpu_custom_call.1} parent=47 // pred_region
          %352 = dma.done %s345, 1024
        $region52: #{tpu_custom_call.1} parent=47 // pred_fallthru
          _
        // Predicated region
        $region53: #{tpu_custom_call.1} parent=47 // pred_check
          %p353 = pneg %p80
        $region54: #{tpu_custom_call.1} parent=47 // pred_check_branch
          %355 = sbr.rel (%p353) target = $region56
        $region55: #{tpu_custom_call.1} parent=47 // pred_region
          %356 = dma.done [#allocation7], 2048
        $region56: #{tpu_custom_call.1} parent=47 // pred_fallthru
          _
        // Predicated region
        $region57: #{tpu_custom_call.1} parent=47 // pred_check
          %p357 = pneg %p101
        $region58: #{tpu_custom_call.1} parent=47 // pred_check_branch
          %359 = sbr.rel (%p357) target = $region60
        $region59: #{tpu_custom_call.1} parent=47 // pred_region
          %360 = dma.done [#allocation7], 4096
        $region60: #{tpu_custom_call.1} parent=47 // pred_fallthru
          _
        // Predicated region
        $region61: #{tpu_custom_call.1} parent=47 // pred_check
          %p361 = pneg %p143
        $region62: #{tpu_custom_call.1} parent=47 // pred_check_branch
          %363 = sbr.rel (%p361) target = $region64
        $region63: #{tpu_custom_call.1} parent=47 // pred_region
          %364 = dma.done [#allocation10], 4096
        $region64: #{tpu_custom_call.1} parent=47 // pred_fallthru
          _
        // Predicated region
        $region65: #{tpu_custom_call.1} parent=47 // pred_check
          %p365 = pneg %p185
        $region66: #{tpu_custom_call.1} parent=47 // pred_check_branch
          %367 = sbr.rel (%p365) target = $region68
        $region67: #{tpu_custom_call.1} parent=47 // pred_region
          %368 = dma.done [#allocation10], 2048
        $region68: #{tpu_custom_call.1} parent=47 // pred_fallthru
          _
        %s369 = sand.u32 %s46, 1
        %s370 = scalar_lea.sflag [#allocation4], %s369
        %s371 = sand.u32 %s46, 1
        %s372 = smul.addr %s371, 64
        %s373 = scalar_lea.vmem [#allocation3], %s372
        %p374 = pneg %p59
        %p375 = pneg %p56
        %p376 = pneg %p80
        %p377 = pneg %p77
        %p378 = pneg %p101
        %p379 = pneg %p98
        %p380 = pneg %p122
        %p381 = pneg %p119
        %p382 = pneg %p143
        %p383 = pneg %p140
        %p384 = pneg %p164
        %p385 = pneg %p161
        %p386 = pneg %p185
        %p387 = pneg %p182
        %p388 = pneg %p211
        %p389 = pneg %p208
        %s390 = smul.u32 8, %s28
        %s391 = smul.u32 2, %s29
        %p392 = scmp.eq.s32.totalorder %s29, 0
        // Predicated region
        $region69: #{tpu_custom_call.1} parent=47 // pred_check
          %p393 = pneg %p392
        $region70: #{tpu_custom_call.1} parent=47 // pred_check_branch
          %395 = sbr.rel (%p393) target = $region72
        $region71: #{tpu_custom_call.1} parent=47 // pred_region
          %396 = vst [vmem:[#allocation2] sm:$0xff] 0.0
        $region72: #{tpu_custom_call.1} parent=47 // pred_fallthru
          _
        %v397 = vld [vmem:[#allocation2] sm:$0xff]
        %v398 = vld [vmem:[%s348] sm:$0xf]
        %v399 = vld [vmem:[%s348 + $0x4] sm:$0xf]
        %v400 = vld [vmem:[%s348 + $0x8] sm:$0xf]
        %v401 = vld [vmem:[%s348 + $0xc] sm:$0xf]
        %v402 = vld [vmem:[%s348 + $0x10] sm:$0xf]
        %v403 = vld [vmem:[%s348 + $0x14] sm:$0xf]
        %v404 = vld [vmem:[%s348 + $0x18] sm:$0xf]
        %v405 = vld [vmem:[%s348 + $0x1c] sm:$0xf]
        %v406 = vld [vmem:[%s348 + $0x20] sm:$0xf]
        %v407 = vld [vmem:[%s348 + $0x24] sm:$0xf]
        %v408 = vld [vmem:[%s348 + $0x28] sm:$0xf]
        %v409 = vld [vmem:[%s348 + $0x2c] sm:$0xf]
        %v410 = vld [vmem:[%s348 + $0x30] sm:$0xf]
        %v411 = vld [vmem:[%s348 + $0x34] sm:$0xf]
        %v412 = vld [vmem:[%s348 + $0x38] sm:$0xf]
        %v413 = vld [vmem:[%s348 + $0x3c] sm:$0xf]
        %v414 = vunpack.c.l.bf16 %v398
        %v415 = vunpack.c.l.bf16 %v399
        %v416 = vunpack.c.l.bf16 %v400
        %v417 = vunpack.c.l.bf16 %v401
        %v418 = vunpack.c.l.bf16 %v402
        %v419 = vunpack.c.l.bf16 %v403
        %v420 = vunpack.c.l.bf16 %v404
        %v421 = vunpack.c.l.bf16 %v405
        %v422 = vunpack.c.l.bf16 %v406
        %v423 = vunpack.c.l.bf16 %v407
        %v424 = vunpack.c.l.bf16 %v408
        %v425 = vunpack.c.l.bf16 %v409
        %v426 = vunpack.c.l.bf16 %v410
        %v427 = vunpack.c.l.bf16 %v411
        %v428 = vunpack.c.l.bf16 %v412
        %v429 = vunpack.c.l.bf16 %v413
        %v430 = vadd.f32 %v414, %v415
        %v431 = vrot.slane %v430, 4
        %v432 = vadd.f32 %v430, %v431
        %v433 = vrot.slane %v432, 2
        %v434 = vadd.f32 %v432, %v433
        %v435 = vrot.slane %v434, 1
        %v436 = vadd.f32 %v434, %v435
        %v437 = vadd.f32 %v416, %v417
        %v438 = vrot.slane %v437, 4
        %v439 = vadd.f32 %v437, %v438
        %v440 = vrot.slane %v439, 2
        %v441 = vadd.f32 %v439, %v440
        %v442 = vrot.slane %v441, 1
        %v443 = vadd.f32 %v441, %v442
        %v444 = vadd.f32 %v418, %v419
        %v445 = vrot.slane %v444, 4
        %v446 = vadd.f32 %v444, %v445
        %v447 = vrot.slane %v446, 2
        %v448 = vadd.f32 %v446, %v447
        %v449 = vrot.slane %v448, 1
        %v450 = vadd.f32 %v448, %v449
        %v451 = vadd.f32 %v420, %v421
        %v452 = vrot.slane %v451, 4
        %v453 = vadd.f32 %v451, %v452
        %v454 = vrot.slane %v453, 2
        %v455 = vadd.f32 %v453, %v454
        %v456 = vrot.slane %v455, 1
        %v457 = vadd.f32 %v455, %v456
        %v458 = vadd.f32 %v422, %v423
        %v459 = vrot.slane %v458, 4
        %v460 = vadd.f32 %v458, %v459
        %v461 = vrot.slane %v460, 2
        %v462 = vadd.f32 %v460, %v461
        %v463 = vrot.slane %v462, 1
        %v464 = vadd.f32 %v462, %v463
        %v465 = vadd.f32 %v424, %v425
        %v466 = vrot.slane %v465, 4
        %v467 = vadd.f32 %v465, %v466
        %v468 = vrot.slane %v467, 2
        %v469 = vadd.f32 %v467, %v468
        %v470 = vrot.slane %v469, 1
        %v471 = vadd.f32 %v469, %v470
        %v472 = vadd.f32 %v426, %v427
        %v473 = vrot.slane %v472, 4
        %v474 = vadd.f32 %v472, %v473
        %v475 = vrot.slane %v474, 2
        %v476 = vadd.f32 %v474, %v475
        %v477 = vrot.slane %v476, 1
        %v478 = vadd.f32 %v476, %v477
        %v479 = vadd.f32 %v428, %v429
        %v480 = vrot.slane %v479, 4
        %v481 = vadd.f32 %v479, %v480
        %v482 = vrot.slane %v481, 2
        %v483 = vadd.f32 %v481, %v482
        %v484 = vrot.slane %v483, 1
        %v485 = vadd.f32 %v483, %v484
        %vm494 = vcmask 1041409
        %v495 = vsel %vm494, %v443, %v436
        %vm496 = vcmask 1042434
        %v497 = vsel %vm496, %v450, %v495
        %vm498 = vcmask 1043459
        %v499 = vsel %vm498, %v457, %v497
        %vm500 = vcmask 1044484
        %v501 = vsel %vm500, %v464, %v499
        %vm502 = vcmask 1045509
        %v503 = vsel %vm502, %v471, %v501
        %vm504 = vcmask 1046534
        %v505 = vsel %vm504, %v478, %v503
        %vm506 = vcmask 1047559
        %v507 = vsel %vm506, %v485, %v505
        %v509 = vadd.f32 %v397, %v507
        %510 = vst [vmem:[#allocation2] sm:$0xff] %v509
        %p511 = scmp.eq.s32.totalorder %s29, 1
        // Predicated region
        $region73: #{tpu_custom_call.1} parent=47 // pred_check
          %p512 = pneg %p511
        $region74: #{tpu_custom_call.1} parent=47 // pred_check_branch
          %514 = sbr.rel (%p512) target = $region76
        $region75: #{tpu_custom_call.1} parent=47 // pred_region
          %v515 = vld [vmem:[#allocation2] sm:$0xff]
          %v516 = vld [vmem:[#allocation6] sm:$0xff]
          %v517 = vld [vmem:[#allocation6 + $0x8] sm:$0xff]
          %v518 = vld [vmem:[#allocation6 + $0x10] sm:$0xff]
          %v519 = vld [vmem:[#allocation6 + $0x18] sm:$0xff]
          %v520 = vld [vmem:[#allocation6 + $0x20] sm:$0xff]
          %v521 = vld [vmem:[#allocation6 + $0x28] sm:$0xff]
          %v522 = vld [vmem:[#allocation6 + $0x30] sm:$0xff]
          %v523 = vld [vmem:[#allocation6 + $0x38] sm:$0xff]
          %v524 = vld [vmem:[#allocation6 + $0x40] sm:$0xff]
          %v525 = vld [vmem:[#allocation6 + $0x48] sm:$0xff]
          %v526 = vld [vmem:[#allocation6 + $0x50] sm:$0xff]
          %v527 = vld [vmem:[#allocation6 + $0x58] sm:$0xff]
          %v528 = vld [vmem:[#allocation6 + $0x60] sm:$0xff]
          %v529 = vld [vmem:[#allocation6 + $0x68] sm:$0xff]
          %v530 = vld [vmem:[#allocation6 + $0x70] sm:$0xff]
          %v531 = vld [vmem:[#allocation6 + $0x78] sm:$0xff]
          %532 = vmatprep.subr.mxu0 0.0
          %533 = vmatpush1.msra.mxu0 %v516
          %534 = vmatprep.subr.mxu0 0.0
          %535 = vmatpush1.msra.mxu0 %v517
          %536 = vmatprep.subr.mxu0 0.0
          %537 = vmatpush1.msra.mxu0 %v518
          %538 = vmatprep.subr.mxu0 0.0
          %539 = vmatpush1.msra.mxu0 %v519
          %540 = vmatprep.subr.mxu0 0.0
          %541 = vmatpush1.msra.mxu0 %v520
          %542 = vmatprep.subr.mxu0 0.0
          %543 = vmatpush1.msra.mxu0 %v521
          %544 = vmatprep.subr.mxu0 0.0
          %545 = vmatpush1.msra.mxu0 %v522
          %546 = vmatprep.subr.mxu0 0.0
          %547 = vmatpush1.msra.mxu0 %v523
          %548 = vmatprep.subr.mxu0 0.0
          %549 = vmatpush1.msra.mxu0 %v524
          %550 = vmatprep.subr.mxu0 0.0
          %551 = vmatpush1.msra.mxu0 %v525
          %552 = vmatprep.subr.mxu0 0.0
          %553 = vmatpush1.msra.mxu0 %v526
          %554 = vmatprep.subr.mxu0 0.0
          %555 = vmatpush1.msra.mxu0 %v527
          %556 = vmatprep.subr.mxu0 0.0
          %557 = vmatpush1.msra.mxu0 %v528
          %558 = vmatprep.subr.mxu0 0.0
          %559 = vmatpush1.msra.mxu0 %v529
          %560 = vmatprep.subr.mxu0 0.0
          %561 = vmatpush1.msra.mxu0 %v530
          %562 = vmatprep.subr.mxu0 0.0
          %563 = vmatpush1.msra.mxu0 %v531
          %564 = vmatprep.subr.mxu0 0.0
          %565 = vmatpush1.msra.mxu0 0.0
          %566 = vmatprep.subr.mxu0 0.0
          %567 = vmatpush1.msra.mxu0 0.0
          %568 = vmatprep.subr.mxu0 0.0
          %569 = vmatpush1.msra.mxu0 0.0
          %570 = vmatprep.subr.mxu0 0.0
          %571 = vmatpush1.msra.mxu0 0.0
          %572 = vmatprep.subr.mxu0 0.0
          %573 = vmatpush1.msra.mxu0 0.0
          %574 = vmatprep.subr.mxu0 0.0
          %575 = vmatpush1.msra.mxu0 0.0
          %576 = vmatprep.subr.mxu0 0.0
          %577 = vmatpush1.msra.mxu0 0.0
          %578 = vmatprep.subr.mxu0 0.0
          %579 = vmatpush1.msra.mxu0 0.0
          %580 = vmatprep.subr.mxu0 0.0
          %581 = vmatpush1.msra.mxu0 0.0
          %582 = vmatprep.subr.mxu0 0.0
          %583 = vmatpush1.msra.mxu0 0.0
          %584 = vmatprep.subr.mxu0 0.0
          %585 = vmatpush1.msra.mxu0 0.0
          %586 = vmatprep.subr.mxu0 0.0
          %587 = vmatpush1.msra.mxu0 0.0
          %588 = vmatprep.subr.mxu0 0.0
          %589 = vmatpush1.msra.mxu0 0.0
          %590 = vmatprep.subr.mxu0 0.0
          %591 = vmatpush1.msra.mxu0 0.0
          %592 = vmatprep.subr.mxu0 0.0
          %593 = vmatpush1.msra.mxu0 0.0
          %594 = vmatprep.subr.mxu0 0.0
          %595 = vmatpush1.msra.mxu0 0.0
          %596 = vmatprep.mubr.f32.mxu0 0.0
          %597 = vmatmul.mubr.f32.gmra.mrb[0].mxu0 %v515
          %v598 = vpop.f32.mrb[0].mxu0
          %v599 = vadd.f32 0.0, %v598
          %v600 = vpop.f32.mrb[0].mxu0
          %601 = vdwg.mxu0
          %v602 = vld [vmem:[#allocation8] sm:$0xff]
          %v603 = vld [vmem:[#allocation8 + $0x8] sm:$0xff]
          %v604 = vld [vmem:[#allocation8 + $0x10] sm:$0xff]
          %v605 = vld [vmem:[#allocation8 + $0x18] sm:$0xff]
          %v606 = vld [vmem:[#allocation8 + $0x20] sm:$0xff]
          %v607 = vld [vmem:[#allocation8 + $0x28] sm:$0xff]
          %v608 = vld [vmem:[#allocation8 + $0x30] sm:$0xff]
          %v609 = vld [vmem:[#allocation8 + $0x38] sm:$0xff]
          %v610 = vld [vmem:[#allocation8 + $0x40] sm:$0xff]
          %v611 = vld [vmem:[#allocation8 + $0x48] sm:$0xff]
          %v612 = vld [vmem:[#allocation8 + $0x50] sm:$0xff]
          %v613 = vld [vmem:[#allocation8 + $0x58] sm:$0xff]
          %v614 = vld [vmem:[#allocation8 + $0x60] sm:$0xff]
          %v615 = vld [vmem:[#allocation8 + $0x68] sm:$0xff]
          %v616 = vld [vmem:[#allocation8 + $0x70] sm:$0xff]
          %v617 = vld [vmem:[#allocation8 + $0x78] sm:$0xff]
          %v618 = vld [vmem:[#allocation8 + $0x80] sm:$0xff]
          %v619 = vld [vmem:[#allocation8 + $0x88] sm:$0xff]
          %v620 = vld [vmem:[#allocation8 + $0x90] sm:$0xff]
          %v621 = vld [vmem:[#allocation8 + $0x98] sm:$0xff]
          %v622 = vld [vmem:[#allocation8 + $0xa0] sm:$0xff]
          %v623 = vld [vmem:[#allocation8 + $0xa8] sm:$0xff]
          %v624 = vld [vmem:[#allocation8 + $0xb0] sm:$0xff]
          %v625 = vld [vmem:[#allocation8 + $0xb8] sm:$0xff]
          %v626 = vld [vmem:[#allocation8 + $0xc0] sm:$0xff]
          %v627 = vld [vmem:[#allocation8 + $0xc8] sm:$0xff]
          %v628 = vld [vmem:[#allocation8 + $0xd0] sm:$0xff]
          %v629 = vld [vmem:[#allocation8 + $0xd8] sm:$0xff]
          %v630 = vld [vmem:[#allocation8 + $0xe0] sm:$0xff]
          %v631 = vld [vmem:[#allocation8 + $0xe8] sm:$0xff]
          %v632 = vld [vmem:[#allocation8 + $0xf0] sm:$0xff]
          %v633 = vld [vmem:[#allocation8 + $0xf8] sm:$0xff]
          %v634 = vld [vmem:[%s3] sm:$0x3]
          %v636 = vlaneseq
          %v637 = vshrl.u32 %v636, 7
          %v638 = vsub.s32 0, %v637
          %v639 = vrot.slane %v634, %v638
          %v640 = vlaneseq
          %v641 = vshrl.u32 %v640, 7
          %v642 = vsub.s32 1, %v641
          %v643 = vrot.slane %v634, %v642
          %646 = vmatprep.subr.mxu0 %v603
          %647 = vmatpush1.msra.mxu0 %v602
          %648 = vmatprep.subr.mxu0 %v605
          %649 = vmatpush1.msra.mxu0 %v604
          %650 = vmatprep.subr.mxu0 %v607
          %651 = vmatpush1.msra.mxu0 %v606
          %652 = vmatprep.subr.mxu0 %v609
          %653 = vmatpush1.msra.mxu0 %v608
          %654 = vmatprep.subr.mxu0 %v611
          %655 = vmatpush1.msra.mxu0 %v610
          %656 = vmatprep.subr.mxu0 %v613
          %657 = vmatpush1.msra.mxu0 %v612
          %658 = vmatprep.subr.mxu0 %v615
          %659 = vmatpush1.msra.mxu0 %v614
          %660 = vmatprep.subr.mxu0 %v617
          %661 = vmatpush1.msra.mxu0 %v616
          %662 = vmatprep.subr.mxu0 %v619
          %663 = vmatpush1.msra.mxu0 %v618
          %664 = vmatprep.subr.mxu0 %v621
          %665 = vmatpush1.msra.mxu0 %v620
          %666 = vmatprep.subr.mxu0 %v623
          %667 = vmatpush1.msra.mxu0 %v622
          %668 = vmatprep.subr.mxu0 %v625
          %669 = vmatpush1.msra.mxu0 %v624
          %670 = vmatprep.subr.mxu0 %v627
          %671 = vmatpush1.msra.mxu0 %v626
          %672 = vmatprep.subr.mxu0 %v629
          %673 = vmatpush1.msra.mxu0 %v628
          %674 = vmatprep.subr.mxu0 %v631
          %675 = vmatpush1.msra.mxu0 %v630
          %676 = vmatprep.subr.mxu0 %v633
          %677 = vmatpush1.msra.mxu0 %v632
          %678 = vmatprep.subr.mxu0 0.0
          %679 = vmatpush1.msra.mxu0 0.0
          %680 = vmatprep.subr.mxu0 0.0
          %681 = vmatpush1.msra.mxu0 0.0
          %682 = vmatprep.subr.mxu0 0.0
          %683 = vmatpush1.msra.mxu0 0.0
          %684 = vmatprep.subr.mxu0 0.0
          %685 = vmatpush1.msra.mxu0 0.0
          %686 = vmatprep.subr.mxu0 0.0
          %687 = vmatpush1.msra.mxu0 0.0
          %688 = vmatprep.subr.mxu0 0.0
          %689 = vmatpush1.msra.mxu0 0.0
          %690 = vmatprep.subr.mxu0 0.0
          %691 = vmatpush1.msra.mxu0 0.0
          %692 = vmatprep.subr.mxu0 0.0
          %693 = vmatpush1.msra.mxu0 0.0
          %694 = vmatprep.subr.mxu0 0.0
          %695 = vmatpush1.msra.mxu0 0.0
          %696 = vmatprep.subr.mxu0 0.0
          %697 = vmatpush1.msra.mxu0 0.0
          %698 = vmatprep.subr.mxu0 0.0
          %699 = vmatpush1.msra.mxu0 0.0
          %700 = vmatprep.subr.mxu0 0.0
          %701 = vmatpush1.msra.mxu0 0.0
          %702 = vmatprep.subr.mxu0 0.0
          %703 = vmatpush1.msra.mxu0 0.0
          %704 = vmatprep.subr.mxu0 0.0
          %705 = vmatpush1.msra.mxu0 0.0
          %706 = vmatprep.subr.mxu0 0.0
          %707 = vmatpush1.msra.mxu0 0.0
          %708 = vmatprep.subr.mxu0 0.0
          %709 = vmatpush1.msra.mxu0 0.0
          %710 = vmatprep.mubr.f32.mxu0 0.0
          %711 = vmatmul.mubr.f32.gmra.mrb[0].mxu0 %v599
          %v712 = vpop.f32.mrb[0].mxu0
          %v713 = vadd.f32 %v639, %v712
          %v714 = vpop.f32.mrb[0].mxu0
          %v715 = vadd.f32 %v643, %v714
          %716 = vdwg.mxu0
          %v717 = vmul.f32 %v713, %v713
          %v718 = vmul.f32 %v715, %v715
          %v719 = vmul.f32 %v713, %v717
          %v720 = vmul.f32 %v715, %v718
          %v721 = vmul.f32 %v719, 0.044715
          %v722 = vmul.f32 %v720, 0.044715
          %v723 = vadd.f32 %v713, %v721
          %v724 = vadd.f32 %v715, %v722
          %v725 = vmul.f32 %v723, 0.7978846
          %v726 = vmul.f32 %v724, 0.7978846
          %v727 = vtanh.pop %v725
          %v728 = vtanh.pop %v726
          %v729 = vadd.f32 %v727, 1.0
          %v730 = vadd.f32 %v728, 1.0
          %v731 = vmul.f32 %v729, 0.5
          %v732 = vmul.f32 %v730, 0.5
          %v733 = vmul.f32 %v713, %v731
          %v734 = vmul.f32 %v715, %v732
          %v735 = vld [vmem:[#allocation9] sm:$0xff]
          %v736 = vld [vmem:[#allocation9 + $0x8] sm:$0xff]
          %v737 = vld [vmem:[#allocation9 + $0x10] sm:$0xff]
          %v738 = vld [vmem:[#allocation9 + $0x18] sm:$0xff]
          %v739 = vld [vmem:[#allocation9 + $0x20] sm:$0xff]
          %v740 = vld [vmem:[#allocation9 + $0x28] sm:$0xff]
          %v741 = vld [vmem:[#allocation9 + $0x30] sm:$0xff]
          %v742 = vld [vmem:[#allocation9 + $0x38] sm:$0xff]
          %v743 = vld [vmem:[#allocation9 + $0x40] sm:$0xff]
          %v744 = vld [vmem:[#allocation9 + $0x48] sm:$0xff]
          %v745 = vld [vmem:[#allocation9 + $0x50] sm:$0xff]
          %v746 = vld [vmem:[#allocation9 + $0x58] sm:$0xff]
          %v747 = vld [vmem:[#allocation9 + $0x60] sm:$0xff]
          %v748 = vld [vmem:[#allocation9 + $0x68] sm:$0xff]
          %v749 = vld [vmem:[#allocation9 + $0x70] sm:$0xff]
          %v750 = vld [vmem:[#allocation9 + $0x78] sm:$0xff]
          %v751 = vld [vmem:[#allocation9 + $0x80] sm:$0xff]
          %v752 = vld [vmem:[#allocation9 + $0x88] sm:$0xff]
          %v753 = vld [vmem:[#allocation9 + $0x90] sm:$0xff]
          %v754 = vld [vmem:[#allocation9 + $0x98] sm:$0xff]
          %v755 = vld [vmem:[#allocation9 + $0xa0] sm:$0xff]
          %v756 = vld [vmem:[#allocation9 + $0xa8] sm:$0xff]
          %v757 = vld [vmem:[#allocation9 + $0xb0] sm:$0xff]
          %v758 = vld [vmem:[#allocation9 + $0xb8] sm:$0xff]
          %v759 = vld [vmem:[#allocation9 + $0xc0] sm:$0xff]
          %v760 = vld [vmem:[#allocation9 + $0xc8] sm:$0xff]
          %v761 = vld [vmem:[#allocation9 + $0xd0] sm:$0xff]
          %v762 = vld [vmem:[#allocation9 + $0xd8] sm:$0xff]
          %v763 = vld [vmem:[#allocation9 + $0xe0] sm:$0xff]
          %v764 = vld [vmem:[#allocation9 + $0xe8] sm:$0xff]
          %v765 = vld [vmem:[#allocation9 + $0xf0] sm:$0xff]
          %v766 = vld [vmem:[#allocation9 + $0xf8] sm:$0xff]
          %v767 = vld [vmem:[%s5] sm:$0x1]
          %v769 = vlaneseq
          %v770 = vshrl.u32 %v769, 7
          %v771 = vsub.s32 0, %v770
          %v772 = vrot.slane %v767, %v771
          %774 = vmatprep.subr.mxu0 0.0
          %775 = vmatpush1.msra.mxu0 %v735
          %776 = vmatprep.subr.mxu0 0.0
          %777 = vmatpush1.msra.mxu0 %v736
          %778 = vmatprep.subr.mxu0 0.0
          %779 = vmatpush1.msra.mxu0 %v737
          %780 = vmatprep.subr.mxu0 0.0
          %781 = vmatpush1.msra.mxu0 %v738
          %782 = vmatprep.subr.mxu0 0.0
          %783 = vmatpush1.msra.mxu0 %v739
          %784 = vmatprep.subr.mxu0 0.0
          %785 = vmatpush1.msra.mxu0 %v740
          %786 = vmatprep.subr.mxu0 0.0
          %787 = vmatpush1.msra.mxu0 %v741
          %788 = vmatprep.subr.mxu0 0.0
          %789 = vmatpush1.msra.mxu0 %v742
          %790 = vmatprep.subr.mxu0 0.0
          %791 = vmatpush1.msra.mxu0 %v743
          %792 = vmatprep.subr.mxu0 0.0
          %793 = vmatpush1.msra.mxu0 %v744
          %794 = vmatprep.subr.mxu0 0.0
          %795 = vmatpush1.msra.mxu0 %v745
          %796 = vmatprep.subr.mxu0 0.0
          %797 = vmatpush1.msra.mxu0 %v746
          %798 = vmatprep.subr.mxu0 0.0
          %799 = vmatpush1.msra.mxu0 %v747
          %800 = vmatprep.subr.mxu0 0.0
          %801 = vmatpush1.msra.mxu0 %v748
          %802 = vmatprep.subr.mxu0 0.0
          %803 = vmatpush1.msra.mxu0 %v749
          %804 = vmatprep.subr.mxu0 0.0
          %805 = vmatpush1.msra.mxu0 %v750
          %806 = vmatprep.subr.mxu0 0.0
          %807 = vmatpush1.msra.mxu0 %v751
          %808 = vmatprep.subr.mxu0 0.0
          %809 = vmatpush1.msra.mxu0 %v752
          %810 = vmatprep.subr.mxu0 0.0
          %811 = vmatpush1.msra.mxu0 %v753
          %812 = vmatprep.subr.mxu0 0.0
          %813 = vmatpush1.msra.mxu0 %v754
          %814 = vmatprep.subr.mxu0 0.0
          %815 = vmatpush1.msra.mxu0 %v755
          %816 = vmatprep.subr.mxu0 0.0
          %817 = vmatpush1.msra.mxu0 %v756
          %818 = vmatprep.subr.mxu0 0.0
          %819 = vmatpush1.msra.mxu0 %v757
          %820 = vmatprep.subr.mxu0 0.0
          %821 = vmatpush1.msra.mxu0 %v758
          %822 = vmatprep.subr.mxu0 0.0
          %823 = vmatpush1.msra.mxu0 %v759
          %824 = vmatprep.subr.mxu0 0.0
          %825 = vmatpush1.msra.mxu0 %v760
          %826 = vmatprep.subr.mxu0 0.0
          %827 = vmatpush1.msra.mxu0 %v761
          %828 = vmatprep.subr.mxu0 0.0
          %829 = vmatpush1.msra.mxu0 %v762
          %830 = vmatprep.subr.mxu0 0.0
          %831 = vmatpush1.msra.mxu0 %v763
          %832 = vmatprep.subr.mxu0 0.0
          %833 = vmatpush1.msra.mxu0 %v764
          %834 = vmatprep.subr.mxu0 0.0
          %835 = vmatpush1.msra.mxu0 %v765
          %836 = vmatprep.subr.mxu0 0.0
          %837 = vmatpush1.msra.mxu0 %v766
          %838 = vmatprep.mubr.f32.mxu0 %v734
          %839 = vmatmul.mubr.f32.gmra.mrb[0].mxu0 %v733
          %v840 = vpop.f32.mrb[0].mxu0
          %v841 = vadd.f32 %v772, %v840
          %v842 = vpop.f32.mrb[0].mxu0
          %843 = vdwg.mxu0
          %v844 = vmul.f32 %v841, %v841
          %845 = vadd.xlane.f32.xlu0 %v844
          %v846 = vpop.xlane.xlu0 %845
          %v847 = vmax.f32 %v846, 1e-24
          %v848 = vrsqrt.pop %v847
          %v849 = vmul.f32 %v841, %v848
          %v850 = vld [vmem:[#allocation11] sm:$0xff]
          %v851 = vld [vmem:[#allocation11 + $0x8] sm:$0xff]
          %v852 = vld [vmem:[#allocation11 + $0x10] sm:$0xff]
          %v853 = vld [vmem:[#allocation11 + $0x18] sm:$0xff]
          %v854 = vld [vmem:[#allocation11 + $0x20] sm:$0xff]
          %v855 = vld [vmem:[#allocation11 + $0x28] sm:$0xff]
          %v856 = vld [vmem:[#allocation11 + $0x30] sm:$0xff]
          %v857 = vld [vmem:[#allocation11 + $0x38] sm:$0xff]
          %v858 = vld [vmem:[#allocation11 + $0x40] sm:$0xff]
          %v859 = vld [vmem:[#allocation11 + $0x48] sm:$0xff]
          %v860 = vld [vmem:[#allocation11 + $0x50] sm:$0xff]
          %v861 = vld [vmem:[#allocation11 + $0x58] sm:$0xff]
          %v862 = vld [vmem:[#allocation11 + $0x60] sm:$0xff]
          %v863 = vld [vmem:[#allocation11 + $0x68] sm:$0xff]
          %v864 = vld [vmem:[#allocation11 + $0x70] sm:$0xff]
          %v865 = vld [vmem:[#allocation11 + $0x78] sm:$0xff]
          %866 = vmatprep.subr.mxu0 0.0
          %867 = vmatpush1.msra.mxu0 %v850
          %868 = vmatprep.subr.mxu0 0.0
          %869 = vmatpush1.msra.mxu0 %v851
          %870 = vmatprep.subr.mxu0 0.0
          %871 = vmatpush1.msra.mxu0 %v852
          %872 = vmatprep.subr.mxu0 0.0
          %873 = vmatpush1.msra.mxu0 %v853
          %874 = vmatprep.subr.mxu0 0.0
          %875 = vmatpush1.msra.mxu0 %v854
          %876 = vmatprep.subr.mxu0 0.0
          %877 = vmatpush1.msra.mxu0 %v855
          %878 = vmatprep.subr.mxu0 0.0
          %879 = vmatpush1.msra.mxu0 %v856
          %880 = vmatprep.subr.mxu0 0.0
          %881 = vmatpush1.msra.mxu0 %v857
          %882 = vmatprep.subr.mxu0 0.0
          %883 = vmatpush1.msra.mxu0 %v858
          %884 = vmatprep.subr.mxu0 0.0
          %885 = vmatpush1.msra.mxu0 %v859
          %886 = vmatprep.subr.mxu0 0.0
          %887 = vmatpush1.msra.mxu0 %v860
          %888 = vmatprep.subr.mxu0 0.0
          %889 = vmatpush1.msra.mxu0 %v861
          %890 = vmatprep.subr.mxu0 0.0
          %891 = vmatpush1.msra.mxu0 %v862
          %892 = vmatprep.subr.mxu0 0.0
          %893 = vmatpush1.msra.mxu0 %v863
          %894 = vmatprep.subr.mxu0 0.0
          %895 = vmatpush1.msra.mxu0 %v864
          %896 = vmatprep.subr.mxu0 0.0
          %897 = vmatpush1.msra.mxu0 %v865
          %898 = vmatprep.subr.mxu0 0.0
          %899 = vmatpush1.msra.mxu0 0.0
          %900 = vmatprep.subr.mxu0 0.0
          %901 = vmatpush1.msra.mxu0 0.0
          %902 = vmatprep.subr.mxu0 0.0
          %903 = vmatpush1.msra.mxu0 0.0
          %904 = vmatprep.subr.mxu0 0.0
          %905 = vmatpush1.msra.mxu0 0.0
          %906 = vmatprep.subr.mxu0 0.0
          %907 = vmatpush1.msra.mxu0 0.0
          %908 = vmatprep.subr.mxu0 0.0
          %909 = vmatpush1.msra.mxu0 0.0
          %910 = vmatprep.subr.mxu0 0.0
          %911 = vmatpush1.msra.mxu0 0.0
          %912 = vmatprep.subr.mxu0 0.0
          %913 = vmatpush1.msra.mxu0 0.0
          %914 = vmatprep.subr.mxu0 0.0
          %915 = vmatpush1.msra.mxu0 0.0
          %916 = vmatprep.subr.mxu0 0.0
          %917 = vmatpush1.msra.mxu0 0.0
          %918 = vmatprep.subr.mxu0 0.0
          %919 = vmatpush1.msra.mxu0 0.0
          %920 = vmatprep.subr.mxu0 0.0
          %921 = vmatpush1.msra.mxu0 0.0
          %922 = vmatprep.subr.mxu0 0.0
          %923 = vmatpush1.msra.mxu0 0.0
          %924 = vmatprep.subr.mxu0 0.0
          %925 = vmatpush1.msra.mxu0 0.0
          %926 = vmatprep.subr.mxu0 0.0
          %927 = vmatpush1.msra.mxu0 0.0
          %928 = vmatprep.subr.mxu0 0.0
          %929 = vmatpush1.msra.mxu0 0.0
          %930 = vmatprep.mubr.f32.mxu0 0.0
          %931 = vmatmul.mubr.f32.gmra.mrb[0].mxu0 %v849
          %v932 = vpop.f32.mrb[0].mxu0
          %v933 = vadd.f32 0.0, %v932
          %v934 = vpop.f32.mrb[0].mxu0
          %935 = vdwg.mxu0
          %936 = vst [vmem:[#allocation12] sm:$0xff] %v933
        $region76: #{tpu_custom_call.1} parent=47 // pred_fallthru
          _
        // Predicated region
        $region77: #{tpu_custom_call.1} parent=47 // pred_check
          %p937 = pneg %p208
        $region78: #{tpu_custom_call.1} parent=47 // pred_check_branch
          %939 = sbr.rel (%p937) target = $region80
        $region79: #{tpu_custom_call.1} parent=47 // pred_region
          %s941 = ssub.s32 128, 128
          %942 = vsyncadd [#allocation5], %s941
          %s943 = smul.addr %s28, 128
          %s944 = scalar_lea.hbm %s7, %s943
          %s946 = sshll.u32 [#allocation12], 4
          %s947 = int_to_ptr.vmem [resolvable:$true] %s946
          %949 = dma.vmem_to_hbm [thread:$0]  %s947, 128, %s944, [#allocation5]
        $region80: #{tpu_custom_call.1} parent=47 // pred_fallthru
          _
        // Predicated region
        $region81: #{tpu_custom_call.1} parent=47 // pred_check
          %p950 = pneg %p208
        $region82: #{tpu_custom_call.1} parent=47 // pred_check_branch
          %952 = sbr.rel (%p950) target = $region84
        $region83: #{tpu_custom_call.1} parent=47 // pred_region
          %953 = dma.done [#allocation5], 128
        $region84: #{tpu_custom_call.1} parent=47 // pred_fallthru
          _
      $region48: #{tpu_custom_call.1} parent=5 // pred_fallthru
        _
      %p954 = scmp.le.s32.totalorder 2, %s19
      // Predicated region
      $region85: #{tpu_custom_call.1} parent=5 // pred_check
        %p955 = pneg %p954
      $region86: #{tpu_custom_call.1} parent=5 // pred_check_branch
        %957 = sbr.rel (%p955) target = $region88
      $region87: #{tpu_custom_call.1} parent=5 // pred_region
        %s958 = ssub.s32 %s19, 2
      $region88: #{tpu_custom_call.1} parent=5 // pred_fallthru
        _
    $region6: #{tpu_custom_call.1} parent=1 // loop_footer
      %s23 = sadd.s32 1, %s19
    $region7: #{tpu_custom_call.1} parent=1 // loop_footer_branch
      %18 = sbr.rel target = $region3
    $region8: #{tpu_custom_call.1} parent=1 // loop_exit
      _
    %959 = vsyncpa [#allocation4], 1
    %s960 = scalar_lea.sflag [#allocation4], 1
    %961 = vsyncpa %s960, 1
    %962 = vsyncpa [#allocation7], 1
    %963 = vsyncpa [#allocation10], 1
    %964 = vsyncpa [#allocation5], 1
    %s965 = scalar_lea.sflag [#allocation5], 1
    %966 = vsyncpa %s965, 1

</llo_original>
